<compile_context>
chip_gen: v7x
topology: tpu7x:2x2x1
jax: 0.10.0
libtpu: 0.0.40
codegen_flags: <defaults>
</compile_context>

<pallas_src>
import jax
import jax.numpy as jnp
from jax.experimental import pallas as pl
from jax.experimental.pallas import tpu as pltpu


def _round_up(x: int, m: int) -> int:
    return ((x + m - 1) // m) * m


def _pad2(a, rows, cols):
    r, c = a.shape
    if r == rows and c == cols:
        return a
    return jnp.pad(a, ((0, rows - r), (0, cols - c)))


def _default_use_bf16() -> bool:
    """bf16 MXU operands by default on v6e/v7x; f32 elsewhere (v5e & older)."""
    try:
        kind = jax.devices()[0].device_kind.lower()
    except Exception:
        return False
    return ("v6" in kind) or ("v7" in kind)


def _mlp_kernel(x_ref, w1_ref, b1_ref, w2_ref, b2_ref, w3_ref, b3_ref, o_ref):
    # Hoist bias loads once (broadcasts are not CSE'd by JAX).
    b1 = b1_ref[...]
    b2 = b2_ref[...]
    b3 = b3_ref[...]

    mm_dtype = w1_ref.dtype                      # f32 or bf16 (set at prepare)
    x = x_ref[...].astype(mm_dtype)              # in-kernel cast, no wrapper pass

    # layer1: Linear + ReLU (f32 accumulation on the MXU, K = real in_dim)
    h1 = jnp.dot(x, w1_ref[...], preferred_element_type=jnp.float32) + b1
    h1 = jnp.maximum(h1, 0.0)
    # layer2: Linear + ReLU
    h2 = jnp.dot(h1.astype(mm_dtype), w2_ref[...],
                 preferred_element_type=jnp.float32) + b2
    h2 = jnp.maximum(h2, 0.0)
    # final: Linear
    y = jnp.dot(h2.astype(mm_dtype), w3_ref[...],
                preferred_element_type=jnp.float32) + b3
    o_ref[...] = y.astype(o_ref.dtype)


def prepare_params(params, *, use_bf16=None):
    """Pad + cast the weights/biases ONCE; keep the padded copies as the
    stored params so forward calls launch no per-call pad/cast ops.

    params: dict with w1 (in,h), b1 (1,h), w2 (h,h), b2 (1,h), w3 (h,out),
            b3 (1,out).  (Weights stored as (in, out): transpose of
            nn.Linear's layout, same math.)
    """
    if use_bf16 is None:
        use_bf16 = _default_use_bf16()
    mm_dtype = jnp.bfloat16 if use_bf16 else jnp.float32

    in_dim, h_dim = params["w1"].shape
    out_dim = params["w3"].shape[1]
    h_p = _round_up(h_dim, 128)
    out_p = _round_up(out_dim, 128)

    prepped = {
        # K dim of w1 is the real in_dim (NOT padded to 128).
        "w1": _pad2(params["w1"], in_dim, h_p).astype(mm_dtype),
        "b1": _pad2(params["b1"], 1, h_p).astype(jnp.float32),
        "w2": _pad2(params["w2"], h_p, h_p).astype(mm_dtype),
        "b2": _pad2(params["b2"], 1, h_p).astype(jnp.float32),
        "w3": _pad2(params["w3"], h_p, out_p).astype(mm_dtype),
        "b3": _pad2(params["b3"], 1, out_p).astype(jnp.float32),
        # static metadata
        "in_dim": in_dim,
        "out_dim": out_dim,
        "h_p": h_p,
        "out_p": out_p,
    }
    # Materialize the one-time pads now.
    for k in ("w1", "b1", "w2", "b2", "w3", "b3"):
        prepped[k] = jax.block_until_ready(prepped[k])
    return prepped


def network_forward(x, prepped, *, tile_m: int = 512, slice_output: bool = True):
    """Run the DQN MLP forward pass as a gridded, lane-dense Pallas kernel.

    Args:
      x: (n, input_dim) float32 state batch (unpadded).
      prepped: output of `prepare_params`.
      tile_m: max batch rows per grid step.
      slice_output: if False, return the padded (n_pad, out_p) buffer so a
        downstream op (e.g. argmax over actions) can consume it directly
        without an extra slice pass.
    Returns:
      (n, output_dim) float32 Q-values (or the padded buffer).
    """
    n, in_dim = x.shape
    assert in_dim == prepped["in_dim"], "input_dim mismatch with prepared params"
    out_dim, h_p, out_p = prepped["out_dim"], prepped["h_p"], prepped["out_p"]

    # Batch tiling: tile is a multiple of 8 (sublane) and divides n_pad.
    n8 = _round_up(n, 8)
    tm = min(tile_m, n8)
    # Keep >= 2 parallel grid steps for large batches so both v7x TCs get work
    # (v5e/v6e have a single TC, where this is harmless).
    if tm == n8 and n8 > 256:
        tm = _round_up(pl.cdiv(n8, 2), 8)
    n_pad = _round_up(n8, tm)

    # Only wrapper op on x: batch-row pad, and only when actually needed.
    xp = x if n_pad == n else jnp.pad(x, ((0, n_pad - n), (0, 0)))

    grid = (n_pad // tm,)

    # x / out tiles walk the batch axis; weights & biases stay VMEM-resident
    # (constant index_maps).  x's last dim is the real in_dim (full extent).
    x_spec = pl.BlockSpec((tm, in_dim), lambda i: (i, 0))
    w1_spec = pl.BlockSpec((in_dim, h_p), lambda i: (0, 0))
    b1_spec = pl.BlockSpec((1, h_p), lambda i: (0, 0))
    w2_spec = pl.BlockSpec((h_p, h_p), lambda i: (0, 0))
    b2_spec = pl.BlockSpec((1, h_p), lambda i: (0, 0))
    w3_spec = pl.BlockSpec((h_p, out_p), lambda i: (0, 0))
    b3_spec = pl.BlockSpec((1, out_p), lambda i: (0, 0))
    o_spec = pl.BlockSpec((tm, out_p), lambda i: (i, 0))

    y_pad = pl.pallas_call(
        _mlp_kernel,
        out_shape=jax.ShapeDtypeStruct((n_pad, out_p), jnp.float32),
        grid_spec=pltpu.PrefetchScalarGridSpec(
            num_scalar_prefetch=0,
            grid=grid,
            in_specs=[x_spec, w1_spec, b1_spec, w2_spec, b2_spec,
                      w3_spec, b3_spec],
            out_specs=o_spec,
        ),
        compiler_params=pltpu.CompilerParams(
            dimension_semantics=("parallel",),
        ),
    )(xp, prepped["w1"], prepped["b1"], prepped["w2"], prepped["b2"],
      prepped["w3"], prepped["b3"])

    if not slice_output:
        return y_pad
    return y_pad[:n, :out_dim]


def init_params(key, input_dim, output_dim, hidden_dim):
    """Deterministic init matching the nn.Linear shapes of NETWORK.__init__."""
    ks = jax.random.split(key, 6)

    def linear(kw, kb, fan_in, fan_out):
        # PyTorch nn.Linear default: U(-1/sqrt(fan_in), 1/sqrt(fan_in))
        bound = 1.0 / jnp.sqrt(jnp.float32(fan_in))
        w = jax.random.uniform(kw, (fan_in, fan_out), jnp.float32, -bound, bound)
        b = jax.random.uniform(kb, (1, fan_out), jnp.float32, -bound, bound)
        return w, b

    w1, b1 = linear(ks[0], ks[1], input_dim, hidden_dim)
    w2, b2 = linear(ks[2], ks[3], hidden_dim, hidden_dim)
    w3, b3 = linear(ks[4], ks[5], hidden_dim, output_dim)
    return {"w1": w1, "b1": b1, "w2": w2, "b2": b2, "w3": w3, "b3": b3}


def network_reference(x, p):
    """Pure-JAX reference for correctness checking."""
    h1 = jnp.maximum(x @ p["w1"] + p["b1"], 0.0)
    h2 = jnp.maximum(h1 @ p["w2"] + p["b2"], 0.0)
    return h2 @ p["w3"] + p["b3"]


if __name__ == "__main__":
    key = jax.random.PRNGKey(0)
    k_x, k_p = jax.random.split(key)

    n, input_dim, output_dim, hidden_dim = 8, 4, 2, 32
    x = jax.random.normal(k_x, (n, input_dim), jnp.float32)
    params = init_params(k_p, input_dim, output_dim, hidden_dim)

    # ---- f32 MXU path: tight 1e-5 tolerance (default on v5e & older). ----
    prepped_f32 = prepare_params(params, use_bf16=False)
    q = jax.block_until_ready(network_forward(x, prepped_f32))
    q_ref = network_reference(x, params)
    assert q.shape == (n, output_dim)
    assert jnp.allclose(q, q_ref, atol=1e-5, rtol=1e-5), "mismatch vs reference"

    # Multi-step grid (parallel batch axis) on a larger batch.
    n_big = 1024
    x_big = jax.random.normal(jax.random.PRNGKey(1), (n_big, input_dim),
                              jnp.float32)
    q_big = jax.block_until_ready(network_forward(x_big, prepped_f32,
                                                  tile_m=512))
    assert q_big.shape == (n_big, output_dim)
    assert jnp.allclose(q_big, network_reference(x_big, params),
                        atol=1e-5, rtol=1e-5), "mismatch (big batch)"

    # ---- bf16-operand MXU path (default on v6e/v7x): looser tolerance. ----
    # NOTE: x (not just weights) is used in bf16, so error is larger than a
    # "bf16 weights, f32 activations" scheme; ~2e-2 tolerance documented here.
    prepped_bf16 = prepare_params(params, use_bf16=True)
    q_bf = jax.block_until_ready(network_forward(x_big, prepped_bf16))
    assert q_bf.shape == (n_big, output_dim)
    assert jnp.allclose(q_bf, network_reference(x_big, params),
                        atol=2e-2, rtol=2e-2), "mismatch (bf16 path)"

    print("KERNEL_OK")
</pallas_src>

<mosaic_0001>
module attributes {stable_mosaic.version = 11 : i64} {
  func.func @_mlp_kernel(%arg0: i32, %arg1: memref<8x4xf32, #tpu.memory_space<vmem>>, %arg2: memref<4x128xf32, #tpu.memory_space<vmem>>, %arg3: memref<1x128xf32, #tpu.memory_space<vmem>>, %arg4: memref<128x128xf32, #tpu.memory_space<vmem>>, %arg5: memref<1x128xf32, #tpu.memory_space<vmem>>, %arg6: memref<128x128xf32, #tpu.memory_space<vmem>>, %arg7: memref<1x128xf32, #tpu.memory_space<vmem>>, %arg8: memref<8x128xf32, #tpu.memory_space<vmem>>) attributes {dimension_semantics = [#tpu.dimension_semantics<parallel>], iteration_bounds = array<i64: 1>, scalar_prefetch = 0 : i64, scratch_operands = 0 : i64, tpu.core_type = #tpu.core_type<tc>, window_params = [{transform_indices = @transform_0, window_bounds = array<i64: 8, 4>}, {pipeline_mode = #tpu.pipeline_mode<synchronous>, transform_indices = @transform_1, window_bounds = array<i64: 4, 128>}, {pipeline_mode = #tpu.pipeline_mode<synchronous>, transform_indices = @transform_2, window_bounds = array<i64: 1, 128>}, {pipeline_mode = #tpu.pipeline_mode<synchronous>, transform_indices = @transform_3, window_bounds = array<i64: 128, 128>}, {pipeline_mode = #tpu.pipeline_mode<synchronous>, transform_indices = @transform_4, window_bounds = array<i64: 1, 128>}, {pipeline_mode = #tpu.pipeline_mode<synchronous>, transform_indices = @transform_5, window_bounds = array<i64: 128, 128>}, {pipeline_mode = #tpu.pipeline_mode<synchronous>, transform_indices = @transform_6, window_bounds = array<i64: 1, 128>}, {transform_indices = @transform_7, window_bounds = array<i64: 8, 128>}]} {
    %c0 = arith.constant 0 : index
    %c0_0 = arith.constant 0 : index
    %0 = vector.load %arg3[%c0, %c0_0] : memref<1x128xf32, #tpu.memory_space<vmem>>, vector<1x128xf32>
    %c0_1 = arith.constant 0 : index
    %c0_2 = arith.constant 0 : index
    %1 = vector.load %arg5[%c0_1, %c0_2] : memref<1x128xf32, #tpu.memory_space<vmem>>, vector<1x128xf32>
    %c0_3 = arith.constant 0 : index
    %c0_4 = arith.constant 0 : index
    %2 = vector.load %arg7[%c0_3, %c0_4] : memref<1x128xf32, #tpu.memory_space<vmem>>, vector<1x128xf32>
    %c0_5 = arith.constant 0 : index
    %c0_6 = arith.constant 0 : index
    %3 = vector.load %arg1[%c0_5, %c0_6] : memref<8x4xf32, #tpu.memory_space<vmem>>, vector<8x4xf32>
    %c0_7 = arith.constant 0 : index
    %c0_8 = arith.constant 0 : index
    %4 = vector.load %arg2[%c0_7, %c0_8] : memref<4x128xf32, #tpu.memory_space<vmem>>, vector<4x128xf32>
    %cst = arith.constant dense<0.000000e+00> : vector<8x128xf32>
    %5 = tpu.matmul %3, %4, %cst {dimension_numbers = #tpu.dot_dimension_numbers<[1], [0], [0], [1], [0, 0, 1, 1], [], []>} : vector<8x4xf32>, vector<4x128xf32>, vector<8x128xf32> -> vector<8x128xf32>
    %6 = vector.broadcast %0 : vector<1x128xf32> to vector<8x128xf32>
    %7 = arith.addf %5, %6 : vector<8x128xf32>
    %cst_9 = arith.constant 0.000000e+00 : f32
    %8 = vector.broadcast %cst_9 : f32 to vector<8x128xf32>
    %9 = arith.maximumf %7, %8 : vector<8x128xf32>
    %c0_10 = arith.constant 0 : index
    %c0_11 = arith.constant 0 : index
    %10 = vector.load %arg4[%c0_10, %c0_11] : memref<128x128xf32, #tpu.memory_space<vmem>>, vector<128x128xf32>
    %cst_12 = arith.constant dense<0.000000e+00> : vector<8x128xf32>
    %11 = tpu.matmul %9, %10, %cst_12 {dimension_numbers = #tpu.dot_dimension_numbers<[1], [0], [0], [1], [0, 0, 1, 1], [], []>} : vector<8x128xf32>, vector<128x128xf32>, vector<8x128xf32> -> vector<8x128xf32>
    %12 = vector.broadcast %1 : vector<1x128xf32> to vector<8x128xf32>
    %13 = arith.addf %11, %12 : vector<8x128xf32>
    %cst_13 = arith.constant 0.000000e+00 : f32
    %14 = vector.broadcast %cst_13 : f32 to vector<8x128xf32>
    %15 = arith.maximumf %13, %14 : vector<8x128xf32>
    %c0_14 = arith.constant 0 : index
    %c0_15 = arith.constant 0 : index
    %16 = vector.load %arg6[%c0_14, %c0_15] : memref<128x128xf32, #tpu.memory_space<vmem>>, vector<128x128xf32>
    %cst_16 = arith.constant dense<0.000000e+00> : vector<8x128xf32>
    %17 = tpu.matmul %15, %16, %cst_16 {dimension_numbers = #tpu.dot_dimension_numbers<[1], [0], [0], [1], [0, 0, 1, 1], [], []>} : vector<8x128xf32>, vector<128x128xf32>, vector<8x128xf32> -> vector<8x128xf32>
    %18 = vector.broadcast %2 : vector<1x128xf32> to vector<8x128xf32>
    %19 = arith.addf %17, %18 : vector<8x128xf32>
    %c0_17 = arith.constant 0 : index
    %c0_18 = arith.constant 0 : index
    %20 = vector.load %arg8[%c0_17, %c0_18] : memref<8x128xf32, #tpu.memory_space<vmem>>, vector<8x128xf32>
    tpu.vector_store %arg8[%c0_17, %c0_18], %19 {strides = array<i32>} : memref<8x128xf32, #tpu.memory_space<vmem>>, vector<8x128xf32>,
    return
  }
  func.func @transform_0(%arg0: i32) -> (i32, i32) {
    %c0_i32 = arith.constant 0 : i32
    %c0_i32_0 = arith.constant 0 : i32
    return %arg0, %c0_i32 : i32, i32
  }
  func.func @transform_1(%arg0: i32) -> (i32, i32) {
    %c0_i32 = arith.constant 0 : i32
    %c0_i32_0 = arith.constant 0 : i32
    %c0_i32_1 = arith.constant 0 : i32
    return %c0_i32, %c0_i32_0 : i32, i32
  }
  func.func @transform_2(%arg0: i32) -> (i32, i32) {
    %c0_i32 = arith.constant 0 : i32
    %c0_i32_0 = arith.constant 0 : i32
    %c0_i32_1 = arith.constant 0 : i32
    return %c0_i32, %c0_i32_0 : i32, i32
  }
  func.func @transform_3(%arg0: i32) -> (i32, i32) {
    %c0_i32 = arith.constant 0 : i32
    %c0_i32_0 = arith.constant 0 : i32
    %c0_i32_1 = arith.constant 0 : i32
    return %c0_i32, %c0_i32_0 : i32, i32
  }
  func.func @transform_4(%arg0: i32) -> (i32, i32) {
    %c0_i32 = arith.constant 0 : i32
    %c0_i32_0 = arith.constant 0 : i32
    %c0_i32_1 = arith.constant 0 : i32
    return %c0_i32, %c0_i32_0 : i32, i32
  }
  func.func @transform_5(%arg0: i32) -> (i32, i32) {
    %c0_i32 = arith.constant 0 : i32
    %c0_i32_0 = arith.constant 0 : i32
    %c0_i32_1 = arith.constant 0 : i32
    return %c0_i32, %c0_i32_0 : i32, i32
  }
  func.func @transform_6(%arg0: i32) -> (i32, i32) {
    %c0_i32 = arith.constant 0 : i32
    %c0_i32_0 = arith.constant 0 : i32
    %c0_i32_1 = arith.constant 0 : i32
    return %c0_i32, %c0_i32_0 : i32, i32
  }
  func.func @transform_7(%arg0: i32) -> (i32, i32) {
    %c0_i32 = arith.constant 0 : i32
    %c0_i32_0 = arith.constant 0 : i32
    return %arg0, %c0_i32 : i32, i32
  }
}

</mosaic_0001>

<llo_original>
// kernel: tpu_custom_call.1
$region0: #{tpu_custom_call.1}
  #allocation0 [shape = 'u32[]', space=smem, size = 0x4, offset = 0x4, fixed_abs, tag = 'smem constant byte address 0x4 - core index']
  #allocation1 [shape = 'u32[144,128]{1,0:T(1,128)}', space=vmem, size = 0x12000, scoped, tag = 'internal scratch']
  %s0 = inlined_call_operand.vmem [shape: f32[8,4], index: 0, kind: input, shape index: {}]
  %s1 = inlined_call_operand.vmem [shape: f32[4,128], index: 1, kind: input, shape index: {}]
  %s2 = inlined_call_operand.vmem [shape: f32[1,128], index: 2, kind: input, shape index: {}]
  %s3 = inlined_call_operand.hbm [shape: f32[128,128], index: 3, kind: input, shape index: {}]
  %s4 = inlined_call_operand.vmem [shape: f32[1,128], index: 4, kind: input, shape index: {}]
  %s5 = inlined_call_operand.hbm [shape: f32[128,128], index: 5, kind: input, shape index: {}]
  %s6 = inlined_call_operand.vmem [shape: f32[1,128], index: 6, kind: input, shape index: {}]
  %s7 = inlined_call_operand.hbm [shape: f32[8,128], index: 7, kind: output, shape index: {}]
  %s8 = sld [smem:[#allocation0]]
  $region46: #{tpu_custom_call.1} parent=0
    _
  %s10 = ssub.s32 1, %s8
  %s11 = scalar_select 0, %s10, %s8
  $region1: #{tpu_custom_call.1} parent=0
    #allocation2 [shape = 'u8[65536]{0}', space=vmem, size = 0x10000, scoped, tag = 'input window, operand 3, single buffered']
    #allocation3 [shape = 's32[1]{0}', space=sflag, size = 0x4, scoped, tag = 'scoped memory for tpu_custom_call.1']
    #allocation4 [shape = 's32[1]{0}', space=sflag, size = 0x4, scoped, tag = 'scoped memory for tpu_custom_call.1']
    #allocation5 [shape = 'u8[65536]{0}', space=vmem, size = 0x10000, scoped, tag = 'input window, operand 5, single buffered']
    #allocation6 [shape = 's32[1]{0}', space=sflag, size = 0x4, scoped, tag = 'scoped memory for tpu_custom_call.1']
    #allocation7 [shape = 'u8[4096]{0}', space=vmem, size = 0x1000, scoped, tag = 'output window, operand 0, single buffered']
    %12 = vsyncpa [#allocation3], 0
    %13 = vsyncpa [#allocation6], 0
    %14 = vsyncpa [#allocation4], 0
    // Predicated region
    $region2: #{tpu_custom_call.1} parent=1 // pred_check
      _
    $region3: #{tpu_custom_call.1} parent=1 // pred_check_branch
      %16 = sbr.rel (0) target = $region5
    $region4: #{tpu_custom_call.1} parent=1 // pred_region
      _
    $region5: #{tpu_custom_call.1} parent=1 // pred_fallthru
      _
    // Predicated region
    $region6: #{tpu_custom_call.1} parent=1 // pred_check
      _
    $region7: #{tpu_custom_call.1} parent=1 // pred_check_branch
      %18 = sbr.rel (0) target = $region9
    $region8: #{tpu_custom_call.1} parent=1 // pred_region
      _
    $region9: #{tpu_custom_call.1} parent=1 // pred_fallthru
      _
    // Predicated region
    $region10: #{tpu_custom_call.1} parent=1 // pred_check
      _
    $region11: #{tpu_custom_call.1} parent=1 // pred_check_branch
      %20 = sbr.rel (0) target = $region13
    $region12: #{tpu_custom_call.1} parent=1 // pred_region
      _
    $region13: #{tpu_custom_call.1} parent=1 // pred_fallthru
      _
    // Predicated region
    $region14: #{tpu_custom_call.1} parent=1 // pred_check
      _
    $region15: #{tpu_custom_call.1} parent=1 // pred_check_branch
      %22 = sbr.rel (0) target = $region17
    $region16: #{tpu_custom_call.1} parent=1 // pred_region
      %s24 = ssub.s32 2048, 2048
      %25 = vsyncadd [#allocation3], %s24
      %s26 = sshll.u32 [#allocation2], 4
      %s27 = int_to_ptr.vmem [resolvable:$true] %s26
      %32 = dma.hbm_to_vmem [thread:$0]  %s3, 2048, %s27, [#allocation3], 128, 128, 8
    $region17: #{tpu_custom_call.1} parent=1 // pred_fallthru
      _
    // Predicated region
    $region18: #{tpu_custom_call.1} parent=1 // pred_check
      _
    $region19: #{tpu_custom_call.1} parent=1 // pred_check_branch
      %34 = sbr.rel (0) target = $region21
    $region20: #{tpu_custom_call.1} parent=1 // pred_region
      _
    $region21: #{tpu_custom_call.1} parent=1 // pred_fallthru
      _
    // Predicated region
    $region22: #{tpu_custom_call.1} parent=1 // pred_check
      _
    $region23: #{tpu_custom_call.1} parent=1 // pred_check_branch
      %36 = sbr.rel (0) target = $region25
    $region24: #{tpu_custom_call.1} parent=1 // pred_region
      %s38 = ssub.s32 2048, 2048
      %39 = vsyncadd [#allocation6], %s38
      %s40 = sshll.u32 [#allocation5], 4
      %s41 = int_to_ptr.vmem [resolvable:$true] %s40
      %46 = dma.hbm_to_vmem [thread:$0]  %s5, 2048, %s41, [#allocation6], 128, 128, 8
    $region25: #{tpu_custom_call.1} parent=1 // pred_fallthru
      _
    // Predicated region
    $region26: #{tpu_custom_call.1} parent=1 // pred_check
      _
    $region27: #{tpu_custom_call.1} parent=1 // pred_check_branch
      %48 = sbr.rel (0) target = $region29
    $region28: #{tpu_custom_call.1} parent=1 // pred_region
      _
    $region29: #{tpu_custom_call.1} parent=1 // pred_fallthru
      _
    // Predicated region
    $region30: #{tpu_custom_call.1} parent=1 // pred_check
      _
    $region31: #{tpu_custom_call.1} parent=1 // pred_check_branch
      %50 = sbr.rel (0) target = $region33
    $region32: #{tpu_custom_call.1} parent=1 // pred_region
      %51 = dma.done [#allocation3], 2048
    $region33: #{tpu_custom_call.1} parent=1 // pred_fallthru
      _
    // Predicated region
    $region34: #{tpu_custom_call.1} parent=1 // pred_check
      _
    $region35: #{tpu_custom_call.1} parent=1 // pred_check_branch
      %53 = sbr.rel (0) target = $region37
    $region36: #{tpu_custom_call.1} parent=1 // pred_region
      %54 = dma.done [#allocation6], 2048
    $region37: #{tpu_custom_call.1} parent=1 // pred_fallthru
      _
    %v55 = vld [vmem:[%s2] sm:$0x1]
    %v56 = vld [vmem:[%s4] sm:$0x1]
    %v57 = vld [vmem:[%s6] sm:$0x1]
    %v58 = vld [vmem:[%s0] sm:$0xff]
    %v59 = vld [vmem:[%s1] sm:$0xf]
    %v61 = vlaneseq
    %v62 = vshrl.u32 %v61, 7
    %v63 = vsub.s32 0, %v62
    %v64 = vrot.slane %v55, %v63
    %vm66 = vcmask 31744
    %v68 = vsel %vm66, %v58, 0
    %vm70 = vcmask 1043456
    %v72 = vsel %vm70, %v59, 0
    %74 = vmatprep.subr.mxu0 0.0
    %75 = vmatpush1.msra.mxu0 %v72
    %76 = vmatprep.subr.mxu0 0.0
    %77 = vmatpush1.msra.mxu0 0.0
    %78 = vmatprep.subr.mxu0 0.0
    %79 = vmatpush1.msra.mxu0 0.0
    %80 = vmatprep.subr.mxu0 0.0
    %81 = vmatpush1.msra.mxu0 0.0
    %82 = vmatprep.subr.mxu0 0.0
    %83 = vmatpush1.msra.mxu0 0.0
    %84 = vmatprep.subr.mxu0 0.0
    %85 = vmatpush1.msra.mxu0 0.0
    %86 = vmatprep.subr.mxu0 0.0
    %87 = vmatpush1.msra.mxu0 0.0
    %88 = vmatprep.subr.mxu0 0.0
    %89 = vmatpush1.msra.mxu0 0.0
    %90 = vmatprep.subr.mxu0 0.0
    %91 = vmatpush1.msra.mxu0 0.0
    %92 = vmatprep.subr.mxu0 0.0
    %93 = vmatpush1.msra.mxu0 0.0
    %94 = vmatprep.subr.mxu0 0.0
    %95 = vmatpush1.msra.mxu0 0.0
    %96 = vmatprep.subr.mxu0 0.0
    %97 = vmatpush1.msra.mxu0 0.0
    %98 = vmatprep.subr.mxu0 0.0
    %99 = vmatpush1.msra.mxu0 0.0
    %100 = vmatprep.subr.mxu0 0.0
    %101 = vmatpush1.msra.mxu0 0.0
    %102 = vmatprep.subr.mxu0 0.0
    %103 = vmatpush1.msra.mxu0 0.0
    %104 = vmatprep.subr.mxu0 0.0
    %105 = vmatpush1.msra.mxu0 0.0
    %106 = vmatprep.subr.mxu0 0.0
    %107 = vmatpush1.msra.mxu0 0.0
    %108 = vmatprep.subr.mxu0 0.0
    %109 = vmatpush1.msra.mxu0 0.0
    %110 = vmatprep.subr.mxu0 0.0
    %111 = vmatpush1.msra.mxu0 0.0
    %112 = vmatprep.subr.mxu0 0.0
    %113 = vmatpush1.msra.mxu0 0.0
    %114 = vmatprep.subr.mxu0 0.0
    %115 = vmatpush1.msra.mxu0 0.0
    %116 = vmatprep.subr.mxu0 0.0
    %117 = vmatpush1.msra.mxu0 0.0
    %118 = vmatprep.subr.mxu0 0.0
    %119 = vmatpush1.msra.mxu0 0.0
    %120 = vmatprep.subr.mxu0 0.0
    %121 = vmatpush1.msra.mxu0 0.0
    %122 = vmatprep.subr.mxu0 0.0
    %123 = vmatpush1.msra.mxu0 0.0
    %124 = vmatprep.subr.mxu0 0.0
    %125 = vmatpush1.msra.mxu0 0.0
    %126 = vmatprep.subr.mxu0 0.0
    %127 = vmatpush1.msra.mxu0 0.0
    %128 = vmatprep.subr.mxu0 0.0
    %129 = vmatpush1.msra.mxu0 0.0
    %130 = vmatprep.subr.mxu0 0.0
    %131 = vmatpush1.msra.mxu0 0.0
    %132 = vmatprep.subr.mxu0 0.0
    %133 = vmatpush1.msra.mxu0 0.0
    %134 = vmatprep.subr.mxu0 0.0
    %135 = vmatpush1.msra.mxu0 0.0
    %136 = vmatprep.subr.mxu0 0.0
    %137 = vmatpush1.msra.mxu0 0.0
    %138 = vmatprep.mubr.f32.mxu0 0.0
    %139 = vmatmul.mubr.f32.gmra.mrb[0].mxu0 %v68
    %v140 = vpop.f32.mrb[0].mxu0
    %v141 = vadd.f32 %v64, %v140
    %v142 = vpop.f32.mrb[0].mxu0
    %143 = vdwg.mxu0
    %v144 = vmax.f32 %v141, 0.0
    %v145 = vld [vmem:[#allocation2] sm:$0xff]
    %v146 = vld [vmem:[#allocation2 + $0x8] sm:$0xff]
    %v147 = vld [vmem:[#allocation2 + $0x10] sm:$0xff]
    %v148 = vld [vmem:[#allocation2 + $0x18] sm:$0xff]
    %v149 = vld [vmem:[#allocation2 + $0x20] sm:$0xff]
    %v150 = vld [vmem:[#allocation2 + $0x28] sm:$0xff]
    %v151 = vld [vmem:[#allocation2 + $0x30] sm:$0xff]
    %v152 = vld [vmem:[#allocation2 + $0x38] sm:$0xff]
    %v153 = vld [vmem:[#allocation2 + $0x40] sm:$0xff]
    %v154 = vld [vmem:[#allocation2 + $0x48] sm:$0xff]
    %v155 = vld [vmem:[#allocation2 + $0x50] sm:$0xff]
    %v156 = vld [vmem:[#allocation2 + $0x58] sm:$0xff]
    %v157 = vld [vmem:[#allocation2 + $0x60] sm:$0xff]
    %v158 = vld [vmem:[#allocation2 + $0x68] sm:$0xff]
    %v159 = vld [vmem:[#allocation2 + $0x70] sm:$0xff]
    %v160 = vld [vmem:[#allocation2 + $0x78] sm:$0xff]
    %v162 = vlaneseq
    %v163 = vshrl.u32 %v162, 7
    %v164 = vsub.s32 0, %v163
    %v165 = vrot.slane %v56, %v164
    %167 = vmatprep.subr.mxu0 0.0
    %168 = vmatpush1.msra.mxu0 %v145
    %169 = vmatprep.subr.mxu0 0.0
    %170 = vmatpush1.msra.mxu0 %v146
    %171 = vmatprep.subr.mxu0 0.0
    %172 = vmatpush1.msra.mxu0 %v147
    %173 = vmatprep.subr.mxu0 0.0
    %174 = vmatpush1.msra.mxu0 %v148
    %175 = vmatprep.subr.mxu0 0.0
    %176 = vmatpush1.msra.mxu0 %v149
    %177 = vmatprep.subr.mxu0 0.0
    %178 = vmatpush1.msra.mxu0 %v150
    %179 = vmatprep.subr.mxu0 0.0
    %180 = vmatpush1.msra.mxu0 %v151
    %181 = vmatprep.subr.mxu0 0.0
    %182 = vmatpush1.msra.mxu0 %v152
    %183 = vmatprep.subr.mxu0 0.0
    %184 = vmatpush1.msra.mxu0 %v153
    %185 = vmatprep.subr.mxu0 0.0
    %186 = vmatpush1.msra.mxu0 %v154
    %187 = vmatprep.subr.mxu0 0.0
    %188 = vmatpush1.msra.mxu0 %v155
    %189 = vmatprep.subr.mxu0 0.0
    %190 = vmatpush1.msra.mxu0 %v156
    %191 = vmatprep.subr.mxu0 0.0
    %192 = vmatpush1.msra.mxu0 %v157
    %193 = vmatprep.subr.mxu0 0.0
    %194 = vmatpush1.msra.mxu0 %v158
    %195 = vmatprep.subr.mxu0 0.0
    %196 = vmatpush1.msra.mxu0 %v159
    %197 = vmatprep.subr.mxu0 0.0
    %198 = vmatpush1.msra.mxu0 %v160
    %199 = vmatprep.subr.mxu0 0.0
    %200 = vmatpush1.msra.mxu0 0.0
    %201 = vmatprep.subr.mxu0 0.0
    %202 = vmatpush1.msra.mxu0 0.0
    %203 = vmatprep.subr.mxu0 0.0
    %204 = vmatpush1.msra.mxu0 0.0
    %205 = vmatprep.subr.mxu0 0.0
    %206 = vmatpush1.msra.mxu0 0.0
    %207 = vmatprep.subr.mxu0 0.0
    %208 = vmatpush1.msra.mxu0 0.0
    %209 = vmatprep.subr.mxu0 0.0
    %210 = vmatpush1.msra.mxu0 0.0
    %211 = vmatprep.subr.mxu0 0.0
    %212 = vmatpush1.msra.mxu0 0.0
    %213 = vmatprep.subr.mxu0 0.0
    %214 = vmatpush1.msra.mxu0 0.0
    %215 = vmatprep.subr.mxu0 0.0
    %216 = vmatpush1.msra.mxu0 0.0
    %217 = vmatprep.subr.mxu0 0.0
    %218 = vmatpush1.msra.mxu0 0.0
    %219 = vmatprep.subr.mxu0 0.0
    %220 = vmatpush1.msra.mxu0 0.0
    %221 = vmatprep.subr.mxu0 0.0
    %222 = vmatpush1.msra.mxu0 0.0
    %223 = vmatprep.subr.mxu0 0.0
    %224 = vmatpush1.msra.mxu0 0.0
    %225 = vmatprep.subr.mxu0 0.0
    %226 = vmatpush1.msra.mxu0 0.0
    %227 = vmatprep.subr.mxu0 0.0
    %228 = vmatpush1.msra.mxu0 0.0
    %229 = vmatprep.subr.mxu0 0.0
    %230 = vmatpush1.msra.mxu0 0.0
    %231 = vmatprep.mubr.f32.mxu0 0.0
    %232 = vmatmul.mubr.f32.gmra.mrb[0].mxu0 %v144
    %v233 = vpop.f32.mrb[0].mxu0
    %v234 = vadd.f32 %v165, %v233
    %v235 = vpop.f32.mrb[0].mxu0
    %236 = vdwg.mxu0
    %v237 = vmax.f32 %v234, 0.0
    %v238 = vld [vmem:[#allocation5] sm:$0xff]
    %v239 = vld [vmem:[#allocation5 + $0x8] sm:$0xff]
    %v240 = vld [vmem:[#allocation5 + $0x10] sm:$0xff]
    %v241 = vld [vmem:[#allocation5 + $0x18] sm:$0xff]
    %v242 = vld [vmem:[#allocation5 + $0x20] sm:$0xff]
    %v243 = vld [vmem:[#allocation5 + $0x28] sm:$0xff]
    %v244 = vld [vmem:[#allocation5 + $0x30] sm:$0xff]
    %v245 = vld [vmem:[#allocation5 + $0x38] sm:$0xff]
    %v246 = vld [vmem:[#allocation5 + $0x40] sm:$0xff]
    %v247 = vld [vmem:[#allocation5 + $0x48] sm:$0xff]
    %v248 = vld [vmem:[#allocation5 + $0x50] sm:$0xff]
    %v249 = vld [vmem:[#allocation5 + $0x58] sm:$0xff]
    %v250 = vld [vmem:[#allocation5 + $0x60] sm:$0xff]
    %v251 = vld [vmem:[#allocation5 + $0x68] sm:$0xff]
    %v252 = vld [vmem:[#allocation5 + $0x70] sm:$0xff]
    %v253 = vld [vmem:[#allocation5 + $0x78] sm:$0xff]
    %v255 = vlaneseq
    %v256 = vshrl.u32 %v255, 7
    %v257 = vsub.s32 0, %v256
    %v258 = vrot.slane %v57, %v257
    %260 = vmatprep.subr.mxu0 0.0
    %261 = vmatpush1.msra.mxu0 %v238
    %262 = vmatprep.subr.mxu0 0.0
    %263 = vmatpush1.msra.mxu0 %v239
    %264 = vmatprep.subr.mxu0 0.0
    %265 = vmatpush1.msra.mxu0 %v240
    %266 = vmatprep.subr.mxu0 0.0
    %267 = vmatpush1.msra.mxu0 %v241
    %268 = vmatprep.subr.mxu0 0.0
    %269 = vmatpush1.msra.mxu0 %v242
    %270 = vmatprep.subr.mxu0 0.0
    %271 = vmatpush1.msra.mxu0 %v243
    %272 = vmatprep.subr.mxu0 0.0
    %273 = vmatpush1.msra.mxu0 %v244
    %274 = vmatprep.subr.mxu0 0.0
    %275 = vmatpush1.msra.mxu0 %v245
    %276 = vmatprep.subr.mxu0 0.0
    %277 = vmatpush1.msra.mxu0 %v246
    %278 = vmatprep.subr.mxu0 0.0
    %279 = vmatpush1.msra.mxu0 %v247
    %280 = vmatprep.subr.mxu0 0.0
    %281 = vmatpush1.msra.mxu0 %v248
    %282 = vmatprep.subr.mxu0 0.0
    %283 = vmatpush1.msra.mxu0 %v249
    %284 = vmatprep.subr.mxu0 0.0
    %285 = vmatpush1.msra.mxu0 %v250
    %286 = vmatprep.subr.mxu0 0.0
    %287 = vmatpush1.msra.mxu0 %v251
    %288 = vmatprep.subr.mxu0 0.0
    %289 = vmatpush1.msra.mxu0 %v252
    %290 = vmatprep.subr.mxu0 0.0
    %291 = vmatpush1.msra.mxu0 %v253
    %292 = vmatprep.subr.mxu0 0.0
    %293 = vmatpush1.msra.mxu0 0.0
    %294 = vmatprep.subr.mxu0 0.0
    %295 = vmatpush1.msra.mxu0 0.0
    %296 = vmatprep.subr.mxu0 0.0
    %297 = vmatpush1.msra.mxu0 0.0
    %298 = vmatprep.subr.mxu0 0.0
    %299 = vmatpush1.msra.mxu0 0.0
    %300 = vmatprep.subr.mxu0 0.0
    %301 = vmatpush1.msra.mxu0 0.0
    %302 = vmatprep.subr.mxu0 0.0
    %303 = vmatpush1.msra.mxu0 0.0
    %304 = vmatprep.subr.mxu0 0.0
    %305 = vmatpush1.msra.mxu0 0.0
    %306 = vmatprep.subr.mxu0 0.0
    %307 = vmatpush1.msra.mxu0 0.0
    %308 = vmatprep.subr.mxu0 0.0
    %309 = vmatpush1.msra.mxu0 0.0
    %310 = vmatprep.subr.mxu0 0.0
    %311 = vmatpush1.msra.mxu0 0.0
    %312 = vmatprep.subr.mxu0 0.0
    %313 = vmatpush1.msra.mxu0 0.0
    %314 = vmatprep.subr.mxu0 0.0
    %315 = vmatpush1.msra.mxu0 0.0
    %316 = vmatprep.subr.mxu0 0.0
    %317 = vmatpush1.msra.mxu0 0.0
    %318 = vmatprep.subr.mxu0 0.0
    %319 = vmatpush1.msra.mxu0 0.0
    %320 = vmatprep.subr.mxu0 0.0
    %321 = vmatpush1.msra.mxu0 0.0
    %322 = vmatprep.subr.mxu0 0.0
    %323 = vmatpush1.msra.mxu0 0.0
    %324 = vmatprep.mubr.f32.mxu0 0.0
    %325 = vmatmul.mubr.f32.gmra.mrb[0].mxu0 %v237
    %v326 = vpop.f32.mrb[0].mxu0
    %v327 = vadd.f32 %v258, %v326
    %v328 = vpop.f32.mrb[0].mxu0
    %329 = vdwg.mxu0
    %330 = vst [vmem:[#allocation7] sm:$0xff] %v327
    // Predicated region
    $region38: #{tpu_custom_call.1} parent=1 // pred_check
      _
    $region39: #{tpu_custom_call.1} parent=1 // pred_check_branch
      %332 = sbr.rel (0) target = $region41
    $region40: #{tpu_custom_call.1} parent=1 // pred_region
      %s334 = ssub.s32 128, 128
      %335 = vsyncadd [#allocation4], %s334
      %s337 = sshll.u32 [#allocation7], 4
      %s338 = int_to_ptr.vmem [resolvable:$true] %s337
      %340 = dma.vmem_to_hbm [thread:$0]  %s338, 128, %s7, [#allocation4]
    $region41: #{tpu_custom_call.1} parent=1 // pred_fallthru
      _
    // Predicated region
    $region42: #{tpu_custom_call.1} parent=1 // pred_check
      _
    $region43: #{tpu_custom_call.1} parent=1 // pred_check_branch
      %342 = sbr.rel (0) target = $region45
    $region44: #{tpu_custom_call.1} parent=1 // pred_region
      %343 = dma.done [#allocation4], 128
    $region45: #{tpu_custom_call.1} parent=1 // pred_fallthru
      _
    %344 = vsyncpa [#allocation3], 1
    %345 = vsyncpa [#allocation6], 1
    %346 = vsyncpa [#allocation4], 1

</llo_original>
